<compile_context>
chip_gen: v7x
topology: tpu7x:2x2x1
jax: 0.10.0
libtpu: 0.0.40
codegen_flags: <defaults>
</compile_context>

<pallas_src>
import functools

import jax
import jax.numpy as jnp
from jax import lax
from jax.experimental import pallas as pl
from jax.experimental.pallas import tpu as pltpu


def mlp_kernel(x_ref, w1_ref, b1_ref, w2_ref, b2_ref, w3_ref, b3_ref, o_ref,
               *, scalar_head, mxu_dtype):
    """Fused 3-layer MLP on one batch tile, feature-major (batch on lanes).

    x_ref  : (bt, n_in)   f32 (native row-major layout; cast in-kernel)
    w1_ref : (h1, n_in)   MXU dtype        b1_ref : (h1, 1) f32
    w2_ref : (h2, h1)     MXU dtype        b2_ref : (h2, 1) f32
    w3_ref : (h2, 1) f32  if scalar_head else (n_out, h2) MXU dtype
    b3_ref : (n_out, 1) f32
    o_ref  : (n_out, bt)  f32
    """
    x = x_ref[...].astype(mxu_dtype)
    # Layer 1: contract w1 (h1, n_in) with x (bt, n_in) over n_in -> (h1, bt).
    # Transposed-RHS contraction keeps compute feature-major without any
    # wrapper-side transpose of x; MXU matmul with f32 accumulation.
    a = lax.dot_general(w1_ref[...], x, (((1,), (1,)), ((), ())),
                        preferred_element_type=jnp.float32)
    a = jnp.maximum(a + b1_ref[...], 0.0)
    # Layer 2: Linear + ReLU.
    a = jnp.dot(w2_ref[...], a.astype(mxu_dtype),
                preferred_element_type=jnp.float32)
    a = jnp.maximum(a + b2_ref[...], 0.0)
    # Output head.
    if scalar_head:
        # n_out == 1: VPU multiply + sublane (XLU) reduction instead of an MXU
        # pass with a single useful column; result is already lane-dense.
        y = jnp.sum(a * w3_ref[...], axis=0, keepdims=True) + b3_ref[...]
    else:
        y = jnp.dot(w3_ref[...], a.astype(mxu_dtype),
                    preferred_element_type=jnp.float32) + b3_ref[...]
    o_ref[...] = y.astype(o_ref.dtype)


def mlp_regression_forward(x, params, *, batch_tile=None, mxu_dtype=jnp.bfloat16):
    """Run the fused MLP kernel. x: (B, n_in) f32; params in PyTorch (out, in) layout."""
    (w1, b1), (w2, b2), (w3, b3) = params
    B, n_in = x.shape
    h1 = w1.shape[0]
    h2 = w2.shape[0]
    n_out = w3.shape[0]

    if batch_tile is None:
        # Single grid step for small batches; large multiple-of-128 tiles
        # otherwise, to amortize the ~0.35us per-grid-step overhead.
        batch_tile = B if B <= 4096 else 512
    assert B % batch_tile == 0, "batch must be divisible by batch_tile"
    num_tiles = B // batch_tile

    scalar_head = (n_out == 1)

    # Weights/biases: tiny one-time casts (weights bf16 for the MXU, biases f32).
    w1_in = w1.astype(mxu_dtype)                          # (h1, n_in)
    w2_in = w2.astype(mxu_dtype)                          # (h2, h1)
    b1_in = b1.reshape(h1, 1).astype(jnp.float32)
    b2_in = b2.reshape(h2, 1).astype(jnp.float32)
    b3_in = b3.reshape(n_out, 1).astype(jnp.float32)
    if scalar_head:
        w3_in = w3.reshape(h2, 1).astype(jnp.float32)     # column for VPU broadcast
        w3_spec = pl.BlockSpec((h2, 1), lambda i: (0, 0))
    else:
        w3_in = w3.astype(mxu_dtype)                      # (n_out, h2)
        w3_spec = pl.BlockSpec((n_out, h2), lambda i: (0, 0))

    rep = lambda i: (0, 0)  # weights/biases replicated across the batch grid
    # NOTE: constant-index weight blocks could be single-buffered
    # (pipeline_mode=pl.Buffered(1)) to save a few KiB of VMEM; negligible here.

    out_t = pl.pallas_call(
        functools.partial(mlp_kernel, scalar_head=scalar_head, mxu_dtype=mxu_dtype),
        out_shape=jax.ShapeDtypeStruct((n_out, B), jnp.float32),
        grid_spec=pltpu.PrefetchScalarGridSpec(
            num_scalar_prefetch=0,
            grid=(num_tiles,),
            in_specs=[
                pl.BlockSpec((batch_tile, n_in), lambda i: (i, 0)),  # x, native layout
                pl.BlockSpec((h1, n_in), rep),                       # w1
                pl.BlockSpec((h1, 1), rep),                          # b1
                pl.BlockSpec((h2, h1), rep),                         # w2
                pl.BlockSpec((h2, 1), rep),                          # b2
                w3_spec,                                             # w3
                pl.BlockSpec((n_out, 1), rep),                       # b3
            ],
            out_specs=pl.BlockSpec((n_out, batch_tile), lambda i: (0, i)),
        ),
        compiler_params=pltpu.CompilerParams(
            dimension_semantics=("parallel",),  # batch tiles shard across TCs on v7x
        ),
    )(x, w1_in, b1_in, w2_in, b2_in, w3_in, b3_in)

    return out_t.T  # (B, n_out); trivial reshape-like transpose for n_out == 1


def init_linear(key, fan_in, fan_out):
    """PyTorch nn.Linear-style init, stored in PyTorch layout: W (out, in), b (out, 1)."""
    kw, kb = jax.random.split(key)
    bound = 1.0 / jnp.sqrt(jnp.float32(fan_in))
    w = jax.random.uniform(kw, (fan_out, fan_in), jnp.float32, -bound, bound)
    b = jax.random.uniform(kb, (fan_out, 1), jnp.float32, -bound, bound)
    return w, b


def reference_forward(x, params, mxu_dtype=jnp.bfloat16):
    """Pure-JAX reference with the same bf16-MXU-input / f32-accumulate numerics."""
    (w1, b1), (w2, b2), (w3, b3) = params
    h = jnp.dot(x.astype(mxu_dtype), w1.T.astype(mxu_dtype),
                preferred_element_type=jnp.float32) + b1.reshape(1, -1)
    h = jnp.maximum(h, 0.0)
    h = jnp.dot(h.astype(mxu_dtype), w2.T.astype(mxu_dtype),
                preferred_element_type=jnp.float32) + b2.reshape(1, -1)
    h = jnp.maximum(h, 0.0)
    return jnp.dot(h, w3.T, preferred_element_type=jnp.float32,
                   precision=jax.lax.Precision.HIGHEST) + b3.reshape(1, -1)


if __name__ == "__main__":
    # Hyper-params implied by MLP_regression defaults (layer_num=3, ReLU,
    # n_output=1); hidden_sizes fixed deterministically instead of
    # random.sample(range(16, 128), 2).
    n_inputs = 16
    hidden_sizes = (64, 32)
    n_output = 1
    batch = 64

    key = jax.random.PRNGKey(0)
    kx, k1, k2, k3 = jax.random.split(key, 4)

    x = jax.random.normal(kx, (batch, n_inputs), jnp.float32)
    params = (
        init_linear(k1, n_inputs, hidden_sizes[0]),
        init_linear(k2, hidden_sizes[0], hidden_sizes[1]),
        init_linear(k3, hidden_sizes[1], n_output),
    )

    # TODO(synk): dropout (p=None by default) is a no-op at inference and is omitted.

    out = mlp_regression_forward(x, params)
    out = jax.block_until_ready(out)

    ref = reference_forward(x, params)
    assert out.shape == (batch, n_output)
    assert jnp.allclose(out, ref, atol=1e-4, rtol=1e-3), float(
        jnp.max(jnp.abs(out - ref)))

    print("KERNEL_OK")
</pallas_src>

<mosaic_0001>
module attributes {stable_mosaic.version = 11 : i64} {
  func.func @mlp_kernel(%arg0: i32, %arg1: memref<64x16xf32, #tpu.memory_space<vmem>>, %arg2: memref<64x16xbf16, #tpu.memory_space<vmem>>, %arg3: memref<64x1xf32, #tpu.memory_space<vmem>>, %arg4: memref<32x64xbf16, #tpu.memory_space<vmem>>, %arg5: memref<32x1xf32, #tpu.memory_space<vmem>>, %arg6: memref<32x1xf32, #tpu.memory_space<vmem>>, %arg7: memref<1x1xf32, #tpu.memory_space<vmem>>, %arg8: memref<1x64xf32, #tpu.memory_space<vmem>>) attributes {dimension_semantics = [#tpu.dimension_semantics<parallel>], iteration_bounds = array<i64: 1>, scalar_prefetch = 0 : i64, scratch_operands = 0 : i64, tpu.core_type = #tpu.core_type<tc>, window_params = [{transform_indices = @transform_0, window_bounds = array<i64: 64, 16>}, {pipeline_mode = #tpu.pipeline_mode<synchronous>, transform_indices = @transform_1, window_bounds = array<i64: 64, 16>}, {pipeline_mode = #tpu.pipeline_mode<synchronous>, transform_indices = @transform_2, window_bounds = array<i64: 64, 1>}, {pipeline_mode = #tpu.pipeline_mode<synchronous>, transform_indices = @transform_3, window_bounds = array<i64: 32, 64>}, {pipeline_mode = #tpu.pipeline_mode<synchronous>, transform_indices = @transform_4, window_bounds = array<i64: 32, 1>}, {pipeline_mode = #tpu.pipeline_mode<synchronous>, transform_indices = @transform_5, window_bounds = array<i64: 32, 1>}, {pipeline_mode = #tpu.pipeline_mode<synchronous>, transform_indices = @transform_6, window_bounds = array<i64: 1, 1>}, {transform_indices = @transform_7, window_bounds = array<i64: 1, 64>}]} {
    %c0 = arith.constant 0 : index
    %c0_0 = arith.constant 0 : index
    %0 = vector.load %arg1[%c0, %c0_0] : memref<64x16xf32, #tpu.memory_space<vmem>>, vector<64x16xf32>
    %1 = arith.truncf %0 : vector<64x16xf32> to vector<64x16xbf16>
    %c0_1 = arith.constant 0 : index
    %c0_2 = arith.constant 0 : index
    %2 = vector.load %arg2[%c0_1, %c0_2] : memref<64x16xbf16, #tpu.memory_space<vmem>>, vector<64x16xbf16>
    %cst = arith.constant dense<0.000000e+00> : vector<64x64xf32>
    %3 = tpu.matmul %2, %1, %cst {dimension_numbers = #tpu.dot_dimension_numbers<[1], [1], [0], [0], [0, 0, 1, 0], [], []>} : vector<64x16xbf16>, vector<64x16xbf16>, vector<64x64xf32> -> vector<64x64xf32>
    %c0_3 = arith.constant 0 : index
    %c0_4 = arith.constant 0 : index
    %4 = vector.load %arg3[%c0_3, %c0_4] : memref<64x1xf32, #tpu.memory_space<vmem>>, vector<64x1xf32>
    %5 = vector.broadcast %4 : vector<64x1xf32> to vector<64x64xf32>
    %6 = arith.addf %3, %5 : vector<64x64xf32>
    %cst_5 = arith.constant 0.000000e+00 : f32
    %7 = vector.broadcast %cst_5 : f32 to vector<64x64xf32>
    %8 = arith.maximumf %6, %7 : vector<64x64xf32>
    %c0_6 = arith.constant 0 : index
    %c0_7 = arith.constant 0 : index
    %9 = vector.load %arg4[%c0_6, %c0_7] : memref<32x64xbf16, #tpu.memory_space<vmem>>, vector<32x64xbf16>
    %10 = arith.truncf %8 : vector<64x64xf32> to vector<64x64xbf16>
    %cst_8 = arith.constant dense<0.000000e+00> : vector<32x64xf32>
    %11 = tpu.matmul %9, %10, %cst_8 {dimension_numbers = #tpu.dot_dimension_numbers<[1], [0], [0], [1], [0, 0, 1, 1], [], []>} : vector<32x64xbf16>, vector<64x64xbf16>, vector<32x64xf32> -> vector<32x64xf32>
    %c0_9 = arith.constant 0 : index
    %c0_10 = arith.constant 0 : index
    %12 = vector.load %arg5[%c0_9, %c0_10] : memref<32x1xf32, #tpu.memory_space<vmem>>, vector<32x1xf32>
    %13 = vector.broadcast %12 : vector<32x1xf32> to vector<32x64xf32>
    %14 = arith.addf %11, %13 : vector<32x64xf32>
    %cst_11 = arith.constant 0.000000e+00 : f32
    %15 = vector.broadcast %cst_11 : f32 to vector<32x64xf32>
    %16 = arith.maximumf %14, %15 : vector<32x64xf32>
    %c0_12 = arith.constant 0 : index
    %c0_13 = arith.constant 0 : index
    %17 = vector.load %arg6[%c0_12, %c0_13] : memref<32x1xf32, #tpu.memory_space<vmem>>, vector<32x1xf32>
    %18 = vector.broadcast %17 : vector<32x1xf32> to vector<32x64xf32>
    %19 = arith.mulf %16, %18 : vector<32x64xf32>
    %cst_14 = arith.constant dense<0.000000e+00> : vector<64xf32>
    %20 = vector.multi_reduction <add>, %19, %cst_14 [0] : vector<32x64xf32> to vector<64xf32>
    %21 = vector.shape_cast %20 : vector<64xf32> to vector<1x64xf32>
    %c0_15 = arith.constant 0 : index
    %c0_16 = arith.constant 0 : index
    %22 = vector.load %arg7[%c0_15, %c0_16] : memref<1x1xf32, #tpu.memory_space<vmem>>, vector<1x1xf32>
    %23 = vector.broadcast %22 : vector<1x1xf32> to vector<1x64xf32>
    %24 = arith.addf %21, %23 : vector<1x64xf32>
    %c0_17 = arith.constant 0 : index
    %c0_18 = arith.constant 0 : index
    %25 = vector.load %arg8[%c0_17, %c0_18] : memref<1x64xf32, #tpu.memory_space<vmem>>, vector<1x64xf32>
    tpu.vector_store %arg8[%c0_17, %c0_18], %24 {strides = array<i32>} : memref<1x64xf32, #tpu.memory_space<vmem>>, vector<1x64xf32>,
    return
  }
  func.func @transform_0(%arg0: i32) -> (i32, i32) {
    %c0_i32 = arith.constant 0 : i32
    %c0_i32_0 = arith.constant 0 : i32
    return %arg0, %c0_i32 : i32, i32
  }
  func.func @transform_1(%arg0: i32) -> (i32, i32) {
    %c0_i32 = arith.constant 0 : i32
    %c0_i32_0 = arith.constant 0 : i32
    %c0_i32_1 = arith.constant 0 : i32
    return %c0_i32, %c0_i32_0 : i32, i32
  }
  func.func @transform_2(%arg0: i32) -> (i32, i32) {
    %c0_i32 = arith.constant 0 : i32
    %c0_i32_0 = arith.constant 0 : i32
    %c0_i32_1 = arith.constant 0 : i32
    return %c0_i32, %c0_i32_0 : i32, i32
  }
  func.func @transform_3(%arg0: i32) -> (i32, i32) {
    %c0_i32 = arith.constant 0 : i32
    %c0_i32_0 = arith.constant 0 : i32
    %c0_i32_1 = arith.constant 0 : i32
    return %c0_i32, %c0_i32_0 : i32, i32
  }
  func.func @transform_4(%arg0: i32) -> (i32, i32) {
    %c0_i32 = arith.constant 0 : i32
    %c0_i32_0 = arith.constant 0 : i32
    %c0_i32_1 = arith.constant 0 : i32
    return %c0_i32, %c0_i32_0 : i32, i32
  }
  func.func @transform_5(%arg0: i32) -> (i32, i32) {
    %c0_i32 = arith.constant 0 : i32
    %c0_i32_0 = arith.constant 0 : i32
    %c0_i32_1 = arith.constant 0 : i32
    return %c0_i32, %c0_i32_0 : i32, i32
  }
  func.func @transform_6(%arg0: i32) -> (i32, i32) {
    %c0_i32 = arith.constant 0 : i32
    %c0_i32_0 = arith.constant 0 : i32
    %c0_i32_1 = arith.constant 0 : i32
    return %c0_i32, %c0_i32_0 : i32, i32
  }
  func.func @transform_7(%arg0: i32) -> (i32, i32) {
    %c0_i32 = arith.constant 0 : i32
    %c0_i32_0 = arith.constant 0 : i32
    return %c0_i32, %arg0 : i32, i32
  }
}

</mosaic_0001>

<llo_original>
// kernel: tpu_custom_call.1
$region0: #{tpu_custom_call.1}
  #allocation0 [shape = 'u32[]', space=smem, size = 0x4, offset = 0x4, fixed_abs, tag = 'smem constant byte address 0x4 - core index']
  #allocation1 [shape = 'u32[144,128]{1,0:T(1,128)}', space=vmem, size = 0x12000, scoped, tag = 'internal scratch']
  #allocation2 [shape = 'f32[1,1]{1,0:T(1,128)S(1)}', space=vmem, size = 0x200, scoped, tag = 'scoped memory for tpu_custom_call.1']
  %s0 = inlined_call_operand.vmem [shape: f32[64,16], index: 0, kind: input, shape index: {}]
  %s1 = inlined_call_operand.vmem [shape: bf16[64,16], index: 1, kind: input, shape index: {}]
  %s2 = inlined_call_operand.vmem [shape: f32[64,1], index: 2, kind: input, shape index: {}]
  %s3 = inlined_call_operand.vmem [shape: bf16[32,64], index: 3, kind: input, shape index: {}]
  %s4 = inlined_call_operand.vmem [shape: f32[32,1], index: 4, kind: input, shape index: {}]
  %s5 = inlined_call_operand.vmem [shape: f32[32,1], index: 5, kind: input, shape index: {}]
  %s6 = inlined_call_operand.<no memory space> [shape: f32[1,1], index: 6, kind: input, shape index: {}]
  %s7 = inlined_call_operand.hbm [shape: f32[1,64], index: 7, kind: output, shape index: {}]
  %s8 = sld [smem:[#allocation0]]
  $region38: #{tpu_custom_call.1} parent=0
    _
  %s10 = ssub.s32 1, %s8
  %s11 = scalar_select 0, %s10, %s8
  %v12 = vstv %s6
  %13 = vst [vmem:[#allocation2] sm:$0x1] %v12
  $region1: #{tpu_custom_call.1} parent=0
    #allocation3 [shape = 'u8[512]{0}', space=vmem, size = 0x400, scoped, tag = 'output window, operand 0, single buffered']
    #allocation4 [shape = 's32[1]{0}', space=sflag, size = 0x4, scoped, tag = 'scoped memory for tpu_custom_call.1']
    %14 = vsyncpa [#allocation4], 0
    // Predicated region
    $region2: #{tpu_custom_call.1} parent=1 // pred_check
      _
    $region3: #{tpu_custom_call.1} parent=1 // pred_check_branch
      %16 = sbr.rel (0) target = $region5
    $region4: #{tpu_custom_call.1} parent=1 // pred_region
      _
    $region5: #{tpu_custom_call.1} parent=1 // pred_fallthru
      _
    // Predicated region
    $region6: #{tpu_custom_call.1} parent=1 // pred_check
      _
    $region7: #{tpu_custom_call.1} parent=1 // pred_check_branch
      %18 = sbr.rel (0) target = $region9
    $region8: #{tpu_custom_call.1} parent=1 // pred_region
      _
    $region9: #{tpu_custom_call.1} parent=1 // pred_fallthru
      _
    // Predicated region
    $region10: #{tpu_custom_call.1} parent=1 // pred_check
      _
    $region11: #{tpu_custom_call.1} parent=1 // pred_check_branch
      %20 = sbr.rel (0) target = $region13
    $region12: #{tpu_custom_call.1} parent=1 // pred_region
      _
    $region13: #{tpu_custom_call.1} parent=1 // pred_fallthru
      _
    // Predicated region
    $region14: #{tpu_custom_call.1} parent=1 // pred_check
      _
    $region15: #{tpu_custom_call.1} parent=1 // pred_check_branch
      %22 = sbr.rel (0) target = $region17
    $region16: #{tpu_custom_call.1} parent=1 // pred_region
      _
    $region17: #{tpu_custom_call.1} parent=1 // pred_fallthru
      _
    // Predicated region
    $region18: #{tpu_custom_call.1} parent=1 // pred_check
      _
    $region19: #{tpu_custom_call.1} parent=1 // pred_check_branch
      %24 = sbr.rel (0) target = $region21
    $region20: #{tpu_custom_call.1} parent=1 // pred_region
      _
    $region21: #{tpu_custom_call.1} parent=1 // pred_fallthru
      _
    // Predicated region
    $region22: #{tpu_custom_call.1} parent=1 // pred_check
      _
    $region23: #{tpu_custom_call.1} parent=1 // pred_check_branch
      %26 = sbr.rel (0) target = $region25
    $region24: #{tpu_custom_call.1} parent=1 // pred_region
      _
    $region25: #{tpu_custom_call.1} parent=1 // pred_fallthru
      _
    // Predicated region
    $region26: #{tpu_custom_call.1} parent=1 // pred_check
      _
    $region27: #{tpu_custom_call.1} parent=1 // pred_check_branch
      %28 = sbr.rel (0) target = $region29
    $region28: #{tpu_custom_call.1} parent=1 // pred_region
      _
    $region29: #{tpu_custom_call.1} parent=1 // pred_fallthru
      _
    %v30 = vld [vmem:[%s0] sm:$0xff]
    %v31 = vld [vmem:[%s0 + $0x8] sm:$0xff]
    %v32 = vld [vmem:[%s0 + $0x10] sm:$0xff]
    %v33 = vld [vmem:[%s0 + $0x18] sm:$0xff]
    %v34 = vld [vmem:[%s0 + $0x20] sm:$0xff]
    %v35 = vld [vmem:[%s0 + $0x28] sm:$0xff]
    %v36 = vld [vmem:[%s0 + $0x30] sm:$0xff]
    %v37 = vld [vmem:[%s0 + $0x38] sm:$0xff]
    %v38 = vpack.c.bf16 %v31, %v30
    %v39 = vpack.c.bf16 %v33, %v32
    %v40 = vpack.c.bf16 %v35, %v34
    %v41 = vpack.c.bf16 %v37, %v36
    %v42 = vld [vmem:[%s1] sm:$0xf]
    %v43 = vld [vmem:[%s1 + $0x4] sm:$0xf]
    %v44 = vld [vmem:[%s1 + $0x8] sm:$0xf]
    %v45 = vld [vmem:[%s1 + $0xc] sm:$0xf]
    %v46 = vld [vmem:[%s1 + $0x10] sm:$0xf]
    %v47 = vld [vmem:[%s1 + $0x14] sm:$0xf]
    %v48 = vld [vmem:[%s1 + $0x18] sm:$0xf]
    %v49 = vld [vmem:[%s1 + $0x1c] sm:$0xf]
    %v50 = vld [vmem:[%s2] sm:$0xff]
    %v51 = vld [vmem:[%s2 + $0x8] sm:$0xff]
    %v52 = vld [vmem:[%s2 + $0x10] sm:$0xff]
    %v53 = vld [vmem:[%s2 + $0x18] sm:$0xff]
    %v54 = vld [vmem:[%s2 + $0x20] sm:$0xff]
    %v55 = vld [vmem:[%s2 + $0x28] sm:$0xff]
    %v56 = vld [vmem:[%s2 + $0x30] sm:$0xff]
    %v57 = vld [vmem:[%s2 + $0x38] sm:$0xff]
    %59 = vset.pattern.permute.xlu0 0
    %60 = vperm.xlu0 %59, %v50
    %v61 = vpop.permute.xlu0 %60
    %64 = vset.pattern.permute.xlu0 0
    %65 = vperm.xlu0 %64, %v51
    %v66 = vpop.permute.xlu0 %65
    %69 = vset.pattern.permute.xlu0 0
    %70 = vperm.xlu0 %69, %v52
    %v71 = vpop.permute.xlu0 %70
    %74 = vset.pattern.permute.xlu0 0
    %75 = vperm.xlu0 %74, %v53
    %v76 = vpop.permute.xlu0 %75
    %79 = vset.pattern.permute.xlu0 0
    %80 = vperm.xlu0 %79, %v54
    %v81 = vpop.permute.xlu0 %80
    %84 = vset.pattern.permute.xlu0 0
    %85 = vperm.xlu0 %84, %v55
    %v86 = vpop.permute.xlu0 %85
    %89 = vset.pattern.permute.xlu0 0
    %90 = vperm.xlu0 %89, %v56
    %v91 = vpop.permute.xlu0 %90
    %94 = vset.pattern.permute.xlu0 0
    %95 = vperm.xlu0 %94, %v57
    %v96 = vpop.permute.xlu0 %95
    %v106 = vunpack.c.l.b16 %v42
    %v107 = vunpack.c.l.b16 %v43
    %v108 = vunpack.c.l.b16 %v44
    %v109 = vunpack.c.l.b16 %v45
    %v110 = vunpack.c.l.b16 %v46
    %v111 = vunpack.c.l.b16 %v47
    %v112 = vunpack.c.l.b16 %v48
    %v113 = vunpack.c.l.b16 %v49
    %v114 = vpack.c.b16 %v107, %v106
    %v115 = vpack.c.b16 %v109, %v108
    %v116 = vpack.c.b16 %v111, %v110
    %v117 = vpack.c.b16 %v113, %v112
    %vm118 = vcmask 130048
    %v120 = vsel %vm118, %v114, 0
    %v123 = vsel %vm118, %v115, 0
    %v126 = vsel %vm118, %v116, 0
    %v129 = vsel %vm118, %v117, 0
    %v132 = vsel %vm118, %v38, 0
    %v135 = vsel %vm118, %v39, 0
    %v138 = vsel %vm118, %v40, 0
    %v141 = vsel %vm118, %v41, 0
    %143 = vmatprep.subr.bf16.mxu0 0
    %144 = vmatpush1.bf16.xpose.msra.mxu0 %v132
    %145 = vmatprep.subr.bf16.mxu0 0
    %146 = vmatpush1.bf16.xpose.msra.mxu0 %v135
    %147 = vmatprep.subr.bf16.mxu0 0
    %148 = vmatpush1.bf16.xpose.msra.mxu0 %v138
    %149 = vmatprep.subr.bf16.mxu0 0
    %150 = vmatpush1.bf16.xpose.msra.mxu0 %v141
    %151 = vmatprep.subr.bf16.mxu0 0
    %152 = vmatpush1.bf16.xpose.msra.mxu0 0
    %153 = vmatprep.subr.bf16.mxu0 0
    %154 = vmatpush1.bf16.xpose.msra.mxu0 0
    %155 = vmatprep.subr.bf16.mxu0 0
    %156 = vmatpush1.bf16.xpose.msra.mxu0 0
    %157 = vmatprep.subr.bf16.mxu0 0
    %158 = vmatpush1.bf16.xpose.msra.mxu0 0
    %159 = vmatprep.subr.bf16.mxu0 0
    %160 = vmatpush1.bf16.xpose.msra.mxu0 0
    %161 = vmatprep.subr.bf16.mxu0 0
    %162 = vmatpush1.bf16.xpose.msra.mxu0 0
    %163 = vmatprep.subr.bf16.mxu0 0
    %164 = vmatpush1.bf16.xpose.msra.mxu0 0
    %165 = vmatprep.subr.bf16.mxu0 0
    %166 = vmatpush1.bf16.xpose.msra.mxu0 0
    %167 = vmatprep.subr.bf16.mxu0 0
    %168 = vmatpush1.bf16.xpose.msra.mxu0 0
    %169 = vmatprep.subr.bf16.mxu0 0
    %170 = vmatpush1.bf16.xpose.msra.mxu0 0
    %171 = vmatprep.subr.bf16.mxu0 0
    %172 = vmatpush1.bf16.xpose.msra.mxu0 0
    %173 = vmatprep.subr.bf16.mxu0 0
    %174 = vmatpush1.bf16.xpose.msra.mxu0 0
    %175 = vmatprep.mubr.bf16.mxu0 0
    %176 = vmatmul.mubr.bf16.gmra.mrb[0].mxu0 %v120
    %v177 = vpop.f32.mrb[0].mxu0
    %v178 = vadd.f32 %v61, %v177
    %v179 = vpop.f32.mrb[0].mxu0
    %v180 = vpop.f32.mrb[0].mxu0
    %v181 = vadd.f32 %v66, %v180
    %v182 = vpop.f32.mrb[0].mxu0
    %183 = vmatprep.mubr.bf16.mxu0 0
    %184 = vmatmul.mubr.bf16.gmra.mrb[0].mxu0 %v123
    %v185 = vpop.f32.mrb[0].mxu0
    %v186 = vadd.f32 %v71, %v185
    %v187 = vpop.f32.mrb[0].mxu0
    %v188 = vpop.f32.mrb[0].mxu0
    %v189 = vadd.f32 %v76, %v188
    %v190 = vpop.f32.mrb[0].mxu0
    %191 = vmatprep.mubr.bf16.mxu0 0
    %192 = vmatmul.mubr.bf16.gmra.mrb[0].mxu0 %v126
    %v193 = vpop.f32.mrb[0].mxu0
    %v194 = vadd.f32 %v81, %v193
    %v195 = vpop.f32.mrb[0].mxu0
    %v196 = vpop.f32.mrb[0].mxu0
    %v197 = vadd.f32 %v86, %v196
    %v198 = vpop.f32.mrb[0].mxu0
    %199 = vmatprep.mubr.bf16.mxu0 0
    %200 = vmatmul.mubr.bf16.gmra.mrb[0].mxu0 %v129
    %v201 = vpop.f32.mrb[0].mxu0
    %v202 = vadd.f32 %v91, %v201
    %v203 = vpop.f32.mrb[0].mxu0
    %v204 = vpop.f32.mrb[0].mxu0
    %v205 = vadd.f32 %v96, %v204
    %v206 = vpop.f32.mrb[0].mxu0
    %207 = vdwg.mxu0
    %v208 = vmax.f32 %v178, 0.0
    %v209 = vmax.f32 %v181, 0.0
    %v210 = vmax.f32 %v186, 0.0
    %v211 = vmax.f32 %v189, 0.0
    %v212 = vmax.f32 %v194, 0.0
    %v213 = vmax.f32 %v197, 0.0
    %v214 = vmax.f32 %v202, 0.0
    %v215 = vmax.f32 %v205, 0.0
    %v216 = vld [vmem:[%s3] sm:$0xf]
    %v217 = vld [vmem:[%s3 + $0x4] sm:$0xf]
    %v218 = vld [vmem:[%s3 + $0x8] sm:$0xf]
    %v219 = vld [vmem:[%s3 + $0xc] sm:$0xf]
    %v220 = vpack.c.bf16 %v209, %v208
    %v221 = vpack.c.bf16 %v211, %v210
    %v222 = vpack.c.bf16 %v213, %v212
    %v223 = vpack.c.bf16 %v215, %v214
    %v224 = vld [vmem:[%s4] sm:$0xff]
    %v225 = vld [vmem:[%s4 + $0x8] sm:$0xff]
    %v226 = vld [vmem:[%s4 + $0x10] sm:$0xff]
    %v227 = vld [vmem:[%s4 + $0x18] sm:$0xff]
    %229 = vset.pattern.permute.xlu0 0
    %230 = vperm.xlu0 %229, %v224
    %v231 = vpop.permute.xlu0 %230
    %234 = vset.pattern.permute.xlu0 0
    %235 = vperm.xlu0 %234, %v225
    %v236 = vpop.permute.xlu0 %235
    %239 = vset.pattern.permute.xlu0 0
    %240 = vperm.xlu0 %239, %v226
    %v241 = vpop.permute.xlu0 %240
    %244 = vset.pattern.permute.xlu0 0
    %245 = vperm.xlu0 %244, %v227
    %v246 = vpop.permute.xlu0 %245
    %v252 = vunpack.c.l.b16 %v216
    %v253 = vunpack.c.l.b16 %v217
    %v254 = vunpack.c.l.b16 %v218
    %v255 = vunpack.c.l.b16 %v219
    %v256 = vpack.c.b16 %v253, %v252
    %v257 = vpack.c.b16 %v255, %v254
    %vm258 = vcmask 523264
    %v260 = vsel %vm258, %v256, 0
    %v263 = vsel %vm258, %v257, 0
    %265 = vmatprep.subr.bf16.mxu0 0
    %266 = vmatpush1.bf16.msra.mxu0 %v220
    %267 = vmatprep.subr.bf16.mxu0 0
    %268 = vmatpush1.bf16.msra.mxu0 %v221
    %269 = vmatprep.subr.bf16.mxu0 0
    %270 = vmatpush1.bf16.msra.mxu0 %v222
    %271 = vmatprep.subr.bf16.mxu0 0
    %272 = vmatpush1.bf16.msra.mxu0 %v223
    %273 = vmatprep.subr.bf16.mxu0 0
    %274 = vmatpush1.bf16.msra.mxu0 0
    %275 = vmatprep.subr.bf16.mxu0 0
    %276 = vmatpush1.bf16.msra.mxu0 0
    %277 = vmatprep.subr.bf16.mxu0 0
    %278 = vmatpush1.bf16.msra.mxu0 0
    %279 = vmatprep.subr.bf16.mxu0 0
    %280 = vmatpush1.bf16.msra.mxu0 0
    %281 = vmatprep.subr.bf16.mxu0 0
    %282 = vmatpush1.bf16.msra.mxu0 0
    %283 = vmatprep.subr.bf16.mxu0 0
    %284 = vmatpush1.bf16.msra.mxu0 0
    %285 = vmatprep.subr.bf16.mxu0 0
    %286 = vmatpush1.bf16.msra.mxu0 0
    %287 = vmatprep.subr.bf16.mxu0 0
    %288 = vmatpush1.bf16.msra.mxu0 0
    %289 = vmatprep.subr.bf16.mxu0 0
    %290 = vmatpush1.bf16.msra.mxu0 0
    %291 = vmatprep.subr.bf16.mxu0 0
    %292 = vmatpush1.bf16.msra.mxu0 0
    %293 = vmatprep.subr.bf16.mxu0 0
    %294 = vmatpush1.bf16.msra.mxu0 0
    %295 = vmatprep.subr.bf16.mxu0 0
    %296 = vmatpush1.bf16.msra.mxu0 0
    %297 = vmatprep.mubr.bf16.mxu0 0
    %298 = vmatmul.mubr.bf16.gmra.mrb[0].mxu0 %v260
    %v299 = vpop.f32.mrb[0].mxu0
    %v300 = vadd.f32 %v231, %v299
    %v301 = vpop.f32.mrb[0].mxu0
    %v302 = vpop.f32.mrb[0].mxu0
    %v303 = vadd.f32 %v236, %v302
    %v304 = vpop.f32.mrb[0].mxu0
    %305 = vmatprep.mubr.bf16.mxu0 0
    %306 = vmatmul.mubr.bf16.gmra.mrb[0].mxu0 %v263
    %v307 = vpop.f32.mrb[0].mxu0
    %v308 = vadd.f32 %v241, %v307
    %v309 = vpop.f32.mrb[0].mxu0
    %v310 = vpop.f32.mrb[0].mxu0
    %v311 = vadd.f32 %v246, %v310
    %v312 = vpop.f32.mrb[0].mxu0
    %313 = vdwg.mxu0
    %v314 = vmax.f32 %v300, 0.0
    %v315 = vmax.f32 %v303, 0.0
    %v316 = vmax.f32 %v308, 0.0
    %v317 = vmax.f32 %v311, 0.0
    %v318 = vld [vmem:[%s5] sm:$0xff]
    %v319 = vld [vmem:[%s5 + $0x8] sm:$0xff]
    %v320 = vld [vmem:[%s5 + $0x10] sm:$0xff]
    %v321 = vld [vmem:[%s5 + $0x18] sm:$0xff]
    %323 = vset.pattern.permute.xlu0 0
    %324 = vperm.xlu0 %323, %v318
    %v325 = vpop.permute.xlu0 %324
    %328 = vset.pattern.permute.xlu0 0
    %329 = vperm.xlu0 %328, %v319
    %v330 = vpop.permute.xlu0 %329
    %333 = vset.pattern.permute.xlu0 0
    %334 = vperm.xlu0 %333, %v320
    %v335 = vpop.permute.xlu0 %334
    %338 = vset.pattern.permute.xlu0 0
    %339 = vperm.xlu0 %338, %v321
    %v340 = vpop.permute.xlu0 %339
    %v342 = vmul.f32 %v314, %v325
    %v343 = vmul.f32 %v315, %v330
    %v344 = vmul.f32 %v316, %v335
    %v345 = vmul.f32 %v317, %v340
    %v346 = vsel %vm258, %v342, 0.0
    %v347 = vsel %vm258, %v343, 0.0
    %v348 = vadd.f32 %v346, %v347
    %v349 = vsel %vm258, %v344, 0.0
    %v350 = vadd.f32 %v348, %v349
    %v351 = vsel %vm258, %v345, 0.0
    %v352 = vadd.f32 %v350, %v351
    %v353 = vrot.slane %v352, 4
    %v354 = vadd.f32 %v352, %v353
    %v355 = vrot.slane %v354, 2
    %v356 = vadd.f32 %v354, %v355
    %v357 = vrot.slane %v356, 1
    %v358 = vadd.f32 %v356, %v357
    %v359 = vld [vmem:[#allocation2] sm:$0x1]
    %361 = vset.pattern.permute.xlu0 0
    %362 = vperm.xlu0 %361, %v359
    %v363 = vpop.permute.xlu0 %362
    %v365 = vlaneseq
    %v366 = vshrl.u32 %v365, 7
    %v367 = vsub.s32 0, %v366
    %v368 = vrot.slane %v363, %v367
    %v369 = vadd.f32 %v358, %v368
    %vm370 = vcmask 516096
    %371 = vst.msk [vmem:[#allocation3] sm:$0x1] %vm370, %v369
    // Predicated region
    $region30: #{tpu_custom_call.1} parent=1 // pred_check
      _
    $region31: #{tpu_custom_call.1} parent=1 // pred_check_branch
      %373 = sbr.rel (0) target = $region33
    $region32: #{tpu_custom_call.1} parent=1 // pred_region
      %s375 = ssub.s32 16, 16
      %376 = vsyncadd [#allocation4], %s375
      %s378 = sshll.u32 [#allocation3], 4
      %s379 = int_to_ptr.vmem [resolvable:$true] %s378
      %381 = dma.vmem_to_hbm [thread:$0]  %s379, 16, %s7, [#allocation4]
    $region33: #{tpu_custom_call.1} parent=1 // pred_fallthru
      _
    // Predicated region
    $region34: #{tpu_custom_call.1} parent=1 // pred_check
      _
    $region35: #{tpu_custom_call.1} parent=1 // pred_check_branch
      %383 = sbr.rel (0) target = $region37
    $region36: #{tpu_custom_call.1} parent=1 // pred_region
      %384 = dma.done [#allocation4], 16
    $region37: #{tpu_custom_call.1} parent=1 // pred_fallthru
      _
    %385 = vsyncpa [#allocation4], 1

</llo_original>
